<compile_context>
chip_gen: v6e
topology: v6e:2x2x1
jax: 0.10.0
libtpu: 0.0.40
codegen_flags: <defaults>
</compile_context>

<pallas_src>
import jax
import jax.numpy as jnp
from jax.experimental import pallas as pl
from jax.experimental.pallas import tpu as pltpu


def _make_triplet_kernel(half: int, bs: int, margin: float):
    a_cnt = bs - half

    def triplet_loss_kernel(feats_ref, out_ref):
        f = feats_ref[...]                        # (bs, D) native dtype -> MXU
        d = f.shape[-1]
        n = f[:half, :]                           # anchor half (offset-0 sublane slice)

        # Fused NT Gram on the MXU: gram[i, j] = n_i . f_j   -> (half, bs)
        #   columns [0:half)  -> n.n pairs, columns [half:bs) -> n.a pairs.
        gram = jax.lax.dot_general(
            n, f,
            dimension_numbers=(((1,), (1,)), ((), ())),
            preferred_element_type=jnp.float32)

        f32 = f.astype(jnp.float32)
        ff = f32 * f32
        # Row-side squared norms, sublane-oriented (half, 1).
        n_sq = jnp.sum(ff[:half, :], axis=-1, keepdims=True)
        # Column-side squared norms, lane-oriented (1, bs), WITHOUT an XLU
        # transpose: ones(1, D) x ff^T on the MXU.
        f_sq = jax.lax.dot_general(
            jnp.ones((1, d), jnp.float32), ff,
            dimension_numbers=(((1,), (1,)), ((), ())),
            preferred_element_type=jnp.float32)   # (1, bs)

        # d2[i, j] = n_sq[i] + f_sq[j] - 2*gram[i, j]; the column-constant
        # f_sq[j] is added AFTER the row reduction (commutes with max/min).
        part = n_sq - 2.0 * gram                  # (half, bs)

        # Reduce max only over n-columns and min only over a-columns (half the
        # XLU / EUP / VPU epilogue work vs. reducing all bs columns twice).
        max_nn = jnp.max(part[:, :half], axis=0, keepdims=True)   # (1, half)
        min_na = jnp.min(part[:, half:], axis=0, keepdims=True)   # (1, a_cnt)

        # sqrt + clamp deferred past the reductions (both monotone).
        n_d_max = jnp.sqrt(jnp.maximum(max_nn + f_sq[:, :half], 0.0))
        a_d_min = jnp.sqrt(jnp.maximum(min_na + f_sq[:, half:], 0.0))
        hinge = jnp.maximum(margin - a_d_min, 0.0)

        if a_cnt == half:
            # Single fused cross-lane sum (one XLU reduction instead of two).
            out_ref[...] = jnp.sum(n_d_max + hinge, keepdims=True) * (1.0 / half)
        else:
            out_ref[...] = (jnp.sum(n_d_max, keepdims=True) * (1.0 / half)
                            + jnp.sum(hinge, keepdims=True) * (1.0 / a_cnt))

    return triplet_loss_kernel


def triplet_loss(feats: jax.Array, margin: float = 100.0) -> jax.Array:
    """feats: (bs, D) -> scalar loss (module semantics), or (B, bs, D) -> (B,)
    batched losses in one gridded launch."""
    single = feats.ndim == 2
    feats_b = feats[None] if single else feats    # unit-dim reshape, no HBM copy
    B, bs, d = feats_b.shape
    assert bs >= 2
    half = bs // 2
    itemsize = feats_b.dtype.itemsize

    cost = pl.CostEstimate(
        flops=B * (2 * half * bs * d + 3 * bs * d + 8 * half * bs),
        transcendentals=B * bs,                   # the sqrt lanes
        bytes_accessed=B * (bs * d * itemsize + 4),
    )

    out = pl.pallas_call(
        _make_triplet_kernel(half, bs, float(margin)),
        out_shape=jax.ShapeDtypeStruct((B, 1), jnp.float32),
        grid=(B,),
        in_specs=[pl.BlockSpec((pl.Squeezed(), bs, d), lambda b: (b, 0, 0))],
        out_specs=pl.BlockSpec((1, 1), lambda b: (b, 0)),
        compiler_params=pltpu.CompilerParams(
            dimension_semantics=("parallel",)),   # megacore: shard the batch axis
        cost_estimate=cost,
    )(feats_b)

    return out[0, 0] if single else out[:, 0]


def _reference_loss(feats, margin=100.0):
    bs = feats.shape[0]
    half = bs // 2
    n = feats[:half].astype(jnp.float32)
    a = feats[half:].astype(jnp.float32)
    n_d = jnp.sqrt(jnp.maximum(
        jnp.sum((n[:, None, :] - n[None, :, :]) ** 2, axis=-1), 0.0))
    a_d = jnp.sqrt(jnp.maximum(
        jnp.sum((n[:, None, :] - a[None, :, :]) ** 2, axis=-1), 0.0))
    n_d_max = jnp.max(n_d, axis=0)
    a_d_min = jnp.min(a_d, axis=0)
    hinge = jnp.maximum(margin - a_d_min, 0.0)
    return jnp.mean(n_d_max) + jnp.mean(hinge)


if __name__ == "__main__":
    key = jax.random.PRNGKey(0)
    bs, d = 8, 32                     # small shapes: batch=8 (half=4), hidden=32
    feats = jax.random.normal(key, (bs, d), dtype=jnp.float32)

    # Single-instance path (matches the PyTorch module's forward exactly).
    loss = jax.block_until_ready(triplet_loss(feats, margin=100.0))
    ref = jax.block_until_ready(_reference_loss(feats, margin=100.0))
    assert jnp.allclose(loss, ref, rtol=1e-5, atol=1e-4), (loss, ref)

    # Batched path: B independent losses in one gridded (parallel) launch.
    B = 4
    feats_b = jax.random.normal(jax.random.PRNGKey(1), (B, bs, d), jnp.float32)
    losses = jax.block_until_ready(triplet_loss(feats_b, margin=100.0))
    refs = jnp.stack([_reference_loss(feats_b[i], margin=100.0) for i in range(B)])
    assert jnp.allclose(losses, refs, rtol=1e-5, atol=1e-4), (losses, refs)

    print("KERNEL_OK")
</pallas_src>

<mosaic_0001>
module attributes {stable_mosaic.version = 11 : i64} {
  func.func @triplet_loss_kernel(%arg0: i32, %arg1: memref<1x8x32xf32, #tpu.memory_space<vmem>>, %arg2: memref<1x1xf32, #tpu.memory_space<vmem>>) attributes {dimension_semantics = [#tpu.dimension_semantics<parallel>], iteration_bounds = array<i64: 1>, scalar_prefetch = 0 : i64, scratch_operands = 0 : i64, tpu.core_type = #tpu.core_type<tc>, window_params = [{transform_indices = @transform_0, window_bounds = array<i64: 1, 8, 32>}, {transform_indices = @transform_1, window_bounds = array<i64: 1, 1>}]} {
    %c0 = arith.constant 0 : index
    %c0_0 = arith.constant 0 : index
    %c0_1 = arith.constant 0 : index
    %0 = vector.load %arg1[%c0, %c0_0, %c0_1] : memref<1x8x32xf32, #tpu.memory_space<vmem>>, vector<1x8x32xf32>
    %1 = vector.shape_cast %0 : vector<1x8x32xf32> to vector<8x32xf32>
    %2 = vector.extract_strided_slice %1 {offsets = [0, 0], sizes = [4, 32], strides = [1, 1]} : vector<8x32xf32> to vector<4x32xf32>
    %cst = arith.constant dense<0.000000e+00> : vector<4x8xf32>
    %3 = tpu.matmul %2, %1, %cst {dimension_numbers = #tpu.dot_dimension_numbers<[1], [1], [0], [0], [0, 0, 1, 0], [], []>} : vector<4x32xf32>, vector<8x32xf32>, vector<4x8xf32> -> vector<4x8xf32>
    %4 = arith.mulf %1, %1 : vector<8x32xf32>
    %5 = vector.extract_strided_slice %4 {offsets = [0, 0], sizes = [4, 32], strides = [1, 1]} : vector<8x32xf32> to vector<4x32xf32>
    %cst_2 = arith.constant dense<0.000000e+00> : vector<4xf32>
    %6 = vector.multi_reduction <add>, %5, %cst_2 [1] : vector<4x32xf32> to vector<4xf32>
    %7 = vector.shape_cast %6 : vector<4xf32> to vector<4x1xf32>
    %cst_3 = arith.constant 1.000000e+00 : f32
    %8 = vector.broadcast %cst_3 : f32 to vector<1x32xf32>
    %cst_4 = arith.constant dense<0.000000e+00> : vector<1x8xf32>
    %9 = tpu.matmul %8, %4, %cst_4 {dimension_numbers = #tpu.dot_dimension_numbers<[1], [1], [0], [0], [0, 0, 1, 0], [], []>} : vector<1x32xf32>, vector<8x32xf32>, vector<1x8xf32> -> vector<1x8xf32>
    %cst_5 = arith.constant 2.000000e+00 : f32
    %10 = vector.broadcast %cst_5 : f32 to vector<4x8xf32>
    %11 = arith.mulf %10, %3 : vector<4x8xf32>
    %12 = vector.broadcast %7 : vector<4x1xf32> to vector<4x8xf32>
    %13 = arith.subf %12, %11 : vector<4x8xf32>
    %14 = vector.extract_strided_slice %13 {offsets = [0, 0], sizes = [4, 4], strides = [1, 1]} : vector<4x8xf32> to vector<4x4xf32>
    %cst_6 = arith.constant dense<0xFF800000> : vector<4xf32>
    %15 = vector.multi_reduction <maximumf>, %14, %cst_6 [0] : vector<4x4xf32> to vector<4xf32>
    %16 = vector.shape_cast %15 : vector<4xf32> to vector<1x4xf32>
    %17 = vector.extract_strided_slice %13 {offsets = [0, 4], sizes = [4, 4], strides = [1, 1]} : vector<4x8xf32> to vector<4x4xf32>
    %cst_7 = arith.constant dense<0x7F800000> : vector<4xf32>
    %18 = vector.multi_reduction <minimumf>, %17, %cst_7 [0] : vector<4x4xf32> to vector<4xf32>
    %19 = vector.shape_cast %18 : vector<4xf32> to vector<1x4xf32>
    %20 = vector.extract_strided_slice %9 {offsets = [0, 0], sizes = [1, 4], strides = [1, 1]} : vector<1x8xf32> to vector<1x4xf32>
    %21 = arith.addf %16, %20 : vector<1x4xf32>
    %cst_8 = arith.constant 0.000000e+00 : f32
    %22 = vector.broadcast %cst_8 : f32 to vector<1x4xf32>
    %23 = arith.maximumf %21, %22 : vector<1x4xf32>
    %24 = math.sqrt %23 : vector<1x4xf32>
    %25 = vector.extract_strided_slice %9 {offsets = [0, 4], sizes = [1, 4], strides = [1, 1]} : vector<1x8xf32> to vector<1x4xf32>
    %26 = arith.addf %19, %25 : vector<1x4xf32>
    %cst_9 = arith.constant 0.000000e+00 : f32
    %27 = vector.broadcast %cst_9 : f32 to vector<1x4xf32>
    %28 = arith.maximumf %26, %27 : vector<1x4xf32>
    %29 = math.sqrt %28 : vector<1x4xf32>
    %cst_10 = arith.constant 1.000000e+02 : f32
    %30 = vector.broadcast %cst_10 : f32 to vector<1x4xf32>
    %31 = arith.subf %30, %29 : vector<1x4xf32>
    %cst_11 = arith.constant 0.000000e+00 : f32
    %32 = vector.broadcast %cst_11 : f32 to vector<1x4xf32>
    %33 = arith.maximumf %31, %32 : vector<1x4xf32>
    %34 = arith.addf %24, %33 : vector<1x4xf32>
    %35 = vector.shape_cast %34 : vector<1x4xf32> to vector<1x1x4xf32>
    %cst_12 = arith.constant dense<0.000000e+00> : vector<1xf32>
    %36 = vector.multi_reduction <add>, %35, %cst_12 [1, 2] : vector<1x1x4xf32> to vector<1xf32>
    %37 = vector.shape_cast %36 : vector<1xf32> to vector<1x1x1xf32>
    %38 = vector.extract %37[0, 0, 0] : f32 from vector<1x1x1xf32>
    %39 = vector.broadcast %38 : f32 to vector<1x1xf32>
    %cst_13 = arith.constant 2.500000e-01 : f32
    %40 = vector.broadcast %cst_13 : f32 to vector<1x1xf32>
    %41 = arith.mulf %39, %40 : vector<1x1xf32>
    %c0_14 = arith.constant 0 : index
    %c0_15 = arith.constant 0 : index
    %42 = vector.load %arg2[%c0_14, %c0_15] : memref<1x1xf32, #tpu.memory_space<vmem>>, vector<1x1xf32>
    tpu.vector_store %arg2[%c0_14, %c0_15], %41 {strides = array<i32>} : memref<1x1xf32, #tpu.memory_space<vmem>>, vector<1x1xf32>,
    return
  }
  func.func @transform_0(%arg0: i32) -> (i32, i32, i32) {
    %c0_i32 = arith.constant 0 : i32
    %c0_i32_0 = arith.constant 0 : i32
    %c0_i32_1 = arith.constant 0 : i32
    return %arg0, %c0_i32, %c0_i32_0 : i32, i32, i32
  }
  func.func @transform_1(%arg0: i32) -> (i32, i32) {
    %c0_i32 = arith.constant 0 : i32
    %c0_i32_0 = arith.constant 0 : i32
    return %arg0, %c0_i32 : i32, i32
  }
}

</mosaic_0001>

<llo_original>
// kernel: tpu_custom_call.1
$region0: #{tpu_custom_call.1}
  #allocation0 [shape = 'u32[]', space=smem, size = 0x4, offset = 0x4, fixed_abs, tag = 'smem constant byte address 0x4 - core index']
  #allocation1 [shape = 'u32[144,128]{1,0:T(1,128)}', space=vmem, size = 0x12000, scoped, tag = 'internal scratch']
  %s0 = inlined_call_operand.hbm [shape: f32[1,8,32], index: 0, kind: input, shape index: {}]
  %s1 = inlined_call_operand.hbm [shape: f32[1,1], index: 1, kind: output, shape index: {}]
  %s2 = sld [smem:[#allocation0]]
  $region18: #{tpu_custom_call.1} parent=0
    _
  %s4 = ssub.s32 1, %s2
  %s5 = scalar_select 0, %s4, %s2
  $region1: #{tpu_custom_call.1} parent=0
    #allocation2 [shape = 'u8[4096]{0}', space=vmem, size = 0x1000, scoped, tag = 'input window, operand 0, single buffered']
    #allocation3 [shape = 's32[1]{0}', space=sflag, size = 0x4, scoped, tag = 'scoped memory for tpu_custom_call.1']
    #allocation4 [shape = 's32[1]{0}', space=sflag, size = 0x4, scoped, tag = 'scoped memory for tpu_custom_call.1']
    #allocation5 [shape = 'u8[512]{0}', space=vmem, size = 0x400, scoped, tag = 'output window, operand 0, single buffered']
    %6 = vsyncpa [#allocation3], 0
    %7 = vsyncpa [#allocation4], 0
    // Predicated region
    $region2: #{tpu_custom_call.1} parent=1 // pred_check
      _
    $region3: #{tpu_custom_call.1} parent=1 // pred_check_branch
      %9 = sbr.rel (0) target = $region5
    $region4: #{tpu_custom_call.1} parent=1 // pred_region
      %s11 = ssub.s32 128, 128
      %12 = vsyncadd [#allocation3], %s11
      %s14 = sshll.u32 [#allocation2], 4
      %s15 = int_to_ptr.vmem [resolvable:$true] %s14
      %17 = dma.hbm_to_vmem [thread:$0]  %s0, 128, %s15, [#allocation3]
    $region5: #{tpu_custom_call.1} parent=1 // pred_fallthru
      _
    // Predicated region
    $region6: #{tpu_custom_call.1} parent=1 // pred_check
      _
    $region7: #{tpu_custom_call.1} parent=1 // pred_check_branch
      %19 = sbr.rel (0) target = $region9
    $region8: #{tpu_custom_call.1} parent=1 // pred_region
      %20 = dma.done [#allocation3], 128
    $region9: #{tpu_custom_call.1} parent=1 // pred_fallthru
      _
    %v21 = vld [vmem:[#allocation2] sm:$0xff]
    %vm22 = vcmask 261120
    %v24 = vsel %vm22, %v21, 0
    %26 = vmatprep.subr.mxu0 0.0
    %27 = vmatpush1.xpose.msra.mxu0 0.0
    %28 = vmatprep.subr.mxu0 0.0
    %29 = vmatpush1.xpose.msra.mxu0 0.0
    %30 = vmatprep.subr.mxu0 0.0
    %31 = vmatpush1.xpose.msra.mxu0 0.0
    %32 = vmatprep.subr.mxu0 0.0
    %33 = vmatpush1.xpose.msra.mxu0 0.0
    %34 = vmatprep.subr.mxu0 0.0
    %35 = vmatpush1.xpose.msra.mxu0 0.0
    %36 = vmatprep.subr.mxu0 0.0
    %37 = vmatpush1.xpose.msra.mxu0 0.0
    %38 = vmatprep.subr.mxu0 0.0
    %39 = vmatpush1.xpose.msra.mxu0 0.0
    %40 = vmatprep.subr.mxu0 0.0
    %41 = vmatpush1.xpose.msra.mxu0 0.0
    %42 = vmatprep.subr.mxu0 0.0
    %43 = vmatpush1.xpose.msra.mxu0 0.0
    %44 = vmatprep.subr.mxu0 0.0
    %45 = vmatpush1.xpose.msra.mxu0 0.0
    %46 = vmatprep.subr.mxu0 0.0
    %47 = vmatpush1.xpose.msra.mxu0 0.0
    %48 = vmatprep.subr.mxu0 0.0
    %49 = vmatpush1.xpose.msra.mxu0 0.0
    %50 = vmatprep.subr.mxu0 0.0
    %51 = vmatpush1.xpose.msra.mxu0 0.0
    %52 = vmatprep.subr.mxu0 0.0
    %53 = vmatpush1.xpose.msra.mxu0 0.0
    %54 = vmatprep.subr.mxu0 0.0
    %55 = vmatpush1.xpose.msra.mxu0 0.0
    %56 = vmatprep.subr.mxu0 0.0
    %57 = vmatpush1.xpose.msra.mxu0 %v24
    %58 = vmatprep.subr.mxu0 0.0
    %59 = vmatpush2.xpose.msra.mxu0 0.0
    %60 = vmatprep.subr.mxu0 0.0
    %61 = vmatpush2.xpose.msra.mxu0 0.0
    %62 = vmatprep.subr.mxu0 0.0
    %63 = vmatpush2.xpose.msra.mxu0 0.0
    %64 = vmatprep.subr.mxu0 0.0
    %65 = vmatpush2.xpose.msra.mxu0 0.0
    %66 = vmatprep.subr.mxu0 0.0
    %67 = vmatpush2.xpose.msra.mxu0 0.0
    %68 = vmatprep.subr.mxu0 0.0
    %69 = vmatpush2.xpose.msra.mxu0 0.0
    %70 = vmatprep.subr.mxu0 0.0
    %71 = vmatpush2.xpose.msra.mxu0 0.0
    %72 = vmatprep.subr.mxu0 0.0
    %73 = vmatpush2.xpose.msra.mxu0 0.0
    %74 = vmatprep.subr.mxu0 0.0
    %75 = vmatpush2.xpose.msra.mxu0 0.0
    %76 = vmatprep.subr.mxu0 0.0
    %77 = vmatpush2.xpose.msra.mxu0 0.0
    %78 = vmatprep.subr.mxu0 0.0
    %79 = vmatpush2.xpose.msra.mxu0 0.0
    %80 = vmatprep.subr.mxu0 0.0
    %81 = vmatpush2.xpose.msra.mxu0 0.0
    %82 = vmatprep.subr.mxu0 0.0
    %83 = vmatpush2.xpose.msra.mxu0 0.0
    %84 = vmatprep.subr.mxu0 0.0
    %85 = vmatpush2.xpose.msra.mxu0 0.0
    %86 = vmatprep.subr.mxu0 0.0
    %87 = vmatpush2.xpose.msra.mxu0 0.0
    %88 = vmatprep.subr.mxu0 0.0
    %89 = vmatpush2.xpose.msra.mxu0 0.0
    %90 = vmatprep.mubr.f32.mxu0 0.0
    %91 = vmatmul.mubr.f32.gmra.mxu0 %v24
    %v92 = vpop.f32.mrf.mxu0
    %v93 = vadd.f32 0.0, %v92
    %v94 = vpop.f32.mrf.mxu0
    %95 = vdwg.mxu0
    %v96 = vmul.f32 %v21, %v21
    %vm97 = vcmask 257024
    %v98 = vsel %vm97, %v96, 0.0
    %99 = vadd.xlane.f32.xlu0 %v98
    %v100 = vpop.xlane.xlu0 %99
    %v102 = vsel %vm22, 1.0, 0
    %v105 = vsel %vm22, %v96, 0
    %107 = vmatprep.subr.mxu0 0.0
    %108 = vmatpush1.xpose.msra.mxu0 0.0
    %109 = vmatprep.subr.mxu0 0.0
    %110 = vmatpush1.xpose.msra.mxu0 0.0
    %111 = vmatprep.subr.mxu0 0.0
    %112 = vmatpush1.xpose.msra.mxu0 0.0
    %113 = vmatprep.subr.mxu0 0.0
    %114 = vmatpush1.xpose.msra.mxu0 0.0
    %115 = vmatprep.subr.mxu0 0.0
    %116 = vmatpush1.xpose.msra.mxu0 0.0
    %117 = vmatprep.subr.mxu0 0.0
    %118 = vmatpush1.xpose.msra.mxu0 0.0
    %119 = vmatprep.subr.mxu0 0.0
    %120 = vmatpush1.xpose.msra.mxu0 0.0
    %121 = vmatprep.subr.mxu0 0.0
    %122 = vmatpush1.xpose.msra.mxu0 0.0
    %123 = vmatprep.subr.mxu0 0.0
    %124 = vmatpush1.xpose.msra.mxu0 0.0
    %125 = vmatprep.subr.mxu0 0.0
    %126 = vmatpush1.xpose.msra.mxu0 0.0
    %127 = vmatprep.subr.mxu0 0.0
    %128 = vmatpush1.xpose.msra.mxu0 0.0
    %129 = vmatprep.subr.mxu0 0.0
    %130 = vmatpush1.xpose.msra.mxu0 0.0
    %131 = vmatprep.subr.mxu0 0.0
    %132 = vmatpush1.xpose.msra.mxu0 0.0
    %133 = vmatprep.subr.mxu0 0.0
    %134 = vmatpush1.xpose.msra.mxu0 0.0
    %135 = vmatprep.subr.mxu0 0.0
    %136 = vmatpush1.xpose.msra.mxu0 0.0
    %137 = vmatprep.subr.mxu0 0.0
    %138 = vmatpush1.xpose.msra.mxu0 %v105
    %139 = vmatprep.subr.mxu0 0.0
    %140 = vmatpush2.xpose.msra.mxu0 0.0
    %141 = vmatprep.subr.mxu0 0.0
    %142 = vmatpush2.xpose.msra.mxu0 0.0
    %143 = vmatprep.subr.mxu0 0.0
    %144 = vmatpush2.xpose.msra.mxu0 0.0
    %145 = vmatprep.subr.mxu0 0.0
    %146 = vmatpush2.xpose.msra.mxu0 0.0
    %147 = vmatprep.subr.mxu0 0.0
    %148 = vmatpush2.xpose.msra.mxu0 0.0
    %149 = vmatprep.subr.mxu0 0.0
    %150 = vmatpush2.xpose.msra.mxu0 0.0
    %151 = vmatprep.subr.mxu0 0.0
    %152 = vmatpush2.xpose.msra.mxu0 0.0
    %153 = vmatprep.subr.mxu0 0.0
    %154 = vmatpush2.xpose.msra.mxu0 0.0
    %155 = vmatprep.subr.mxu0 0.0
    %156 = vmatpush2.xpose.msra.mxu0 0.0
    %157 = vmatprep.subr.mxu0 0.0
    %158 = vmatpush2.xpose.msra.mxu0 0.0
    %159 = vmatprep.subr.mxu0 0.0
    %160 = vmatpush2.xpose.msra.mxu0 0.0
    %161 = vmatprep.subr.mxu0 0.0
    %162 = vmatpush2.xpose.msra.mxu0 0.0
    %163 = vmatprep.subr.mxu0 0.0
    %164 = vmatpush2.xpose.msra.mxu0 0.0
    %165 = vmatprep.subr.mxu0 0.0
    %166 = vmatpush2.xpose.msra.mxu0 0.0
    %167 = vmatprep.subr.mxu0 0.0
    %168 = vmatpush2.xpose.msra.mxu0 0.0
    %169 = vmatprep.subr.mxu0 0.0
    %170 = vmatpush2.xpose.msra.mxu0 0.0
    %171 = vmatprep.mubr.f32.mxu0 0.0
    %172 = vmatmul.mubr.f32.gmra.mxu0 %v102
    %v173 = vpop.f32.mrf.mxu0
    %v174 = vadd.f32 0.0, %v173
    %v175 = vpop.f32.mrf.mxu0
    %176 = vdwg.mxu0
    %v177 = vmul.f32 %v93, 2.0
    %v178 = vsub.f32 %v100, %v177
    %vm179 = vcmask 27648
    %v180 = vsel %vm179, %v178, -inf
    %v181 = vrot.slane %v180, 4
    %v182 = vmax.f32 %v180, %v181
    %v183 = vrot.slane %v182, 2
    %v184 = vmax.f32 %v182, %v183
    %v185 = vrot.slane %v184, 1
    %v186 = vmax.f32 %v184, %v185
    %vm187 = vcmask 60448
    %v188 = vsel %vm187, %v178, inf
    %v189 = vrot.slane %v188, 4
    %v190 = vmin.f32 %v188, %v189
    %v191 = vrot.slane %v190, 2
    %v192 = vmin.f32 %v190, %v191
    %v193 = vrot.slane %v192, 1
    %v194 = vmin.f32 %v192, %v193
    %v195 = vadd.f32 %v186, %v174
    %v196 = vmax.f32 %v195, 0.0
    %v197 = vrsqrt.pop %v196
    %v198 = vmul.f32 %v196, %v197
    %vm199 = vcmp.eq.f32.partialorder %v196, inf
    %v200 = vsel %vm199, %v196, %v198
    %vm201 = vcmp.eq.f32.partialorder %v196, 0.0
    %v202 = vand.u32 %v196, 2147483648
    %v203 = vsel %vm201, %v202, %v200
    %v204 = vadd.f32 %v194, %v174
    %v205 = vmax.f32 %v204, 0.0
    %v206 = vrsqrt.pop %v205
    %v207 = vmul.f32 %v205, %v206
    %vm208 = vcmp.eq.f32.partialorder %v205, inf
    %v209 = vsel %vm208, %v205, %v207
    %vm210 = vcmp.eq.f32.partialorder %v205, 0.0
    %v211 = vand.u32 %v205, 2147483648
    %v212 = vsel %vm210, %v211, %v209
    %v213 = vsub.f32 100.0, %v212
    %v214 = vmax.f32 %v213, 0.0
    %216 = vrot.lane.b32.xlu0 %v214, 124
    %v217 = vpop.permute.xlu0 %216
    %v219 = vadd.f32 %v203, %v217
    %vm220 = vcmask 24576
    %v221 = vsel %vm220, %v219, 0.0
    %222 = vadd.xlane.f32.xlu0 %v221
    %v223 = vpop.xlane.xlu0 %222
    %v224 = vrot.slane %v223, 4
    %v225 = vadd.f32 %v223, %v224
    %v226 = vrot.slane %v225, 2
    %v227 = vadd.f32 %v225, %v226
    %v228 = vrot.slane %v227, 1
    %v229 = vadd.f32 %v227, %v228
    %s230 = vtos %v229
    %v231 = vstv %s230
    %v232 = vmul.f32 %v231, 0.25
    %vm233 = vcmask 0
    %234 = vst.msk [vmem:[#allocation5] sm:$0x1] %vm233, %v232
    // Predicated region
    $region10: #{tpu_custom_call.1} parent=1 // pred_check
      _
    $region11: #{tpu_custom_call.1} parent=1 // pred_check_branch
      %236 = sbr.rel (0) target = $region13
    $region12: #{tpu_custom_call.1} parent=1 // pred_region
      %s238 = ssub.s32 16, 16
      %239 = vsyncadd [#allocation4], %s238
      %s241 = sshll.u32 [#allocation5], 4
      %s242 = int_to_ptr.vmem [resolvable:$true] %s241
      %244 = dma.vmem_to_hbm [thread:$0]  %s242, 16, %s1, [#allocation4]
    $region13: #{tpu_custom_call.1} parent=1 // pred_fallthru
      _
    // Predicated region
    $region14: #{tpu_custom_call.1} parent=1 // pred_check
      _
    $region15: #{tpu_custom_call.1} parent=1 // pred_check_branch
      %246 = sbr.rel (0) target = $region17
    $region16: #{tpu_custom_call.1} parent=1 // pred_region
      %247 = dma.done [#allocation4], 16
    $region17: #{tpu_custom_call.1} parent=1 // pred_fallthru
      _
    %248 = vsyncpa [#allocation3], 1
    %249 = vsyncpa [#allocation4], 1

</llo_original>
